<compile_context>
chip_gen: v7x
topology: tpu7x:2x2x1
jax: 0.10.0
libtpu: 0.0.40
codegen_flags: <defaults>
</compile_context>

<pallas_src>
import jax
import jax.numpy as jnp
from jax.experimental import pallas as pl
from jax.experimental.pallas import tpu as pltpu


def _cdiv(a, b):
    return -(-a // b)


def _round_up(x, m):
    return _cdiv(x, m) * m


def _lane_pad(n):
    return _round_up(max(int(n), 1), 128)


# --------------------------------------------------------------------------- #
# Kernel
# --------------------------------------------------------------------------- #
def _make_svn_kernel(rk, rh):
    """Fused packed MLP: (x @ W1_bd + b1) -> ReLU -> (@ W2_bd + b2)."""

    def kernel(x_ref, w1b1_ref, w2b2_ref, out_ref):
        # x_ref    : [tile_bp, rk]   f32   (rk = r*n_inputs; lane-dense when r>1)
        # w1b1_ref : [rk + 1, rh]    bf16  (row rk holds b1 tiled r times)
        # w2b2_ref : [rh + 1, ra]    bf16  (row rh holds b2 tiled r times)
        # out_ref  : [tile_bp, ra]   f32   (ra = r*n_actions)
        x = x_ref[...].astype(jnp.bfloat16)          # VPU cast, hidden under MXU

        # Layer 1: bf16 MXU dot, f32 accumulation; bias add + ReLU in f32.
        w1 = w1b1_ref[:rk, :]                        # [rk, rh] bf16 (16-aligned slice)
        b1 = w1b1_ref[rk:, :].astype(jnp.float32)    # [1, rh]
        h = jnp.dot(x, w1, preferred_element_type=jnp.float32) + b1
        h = jnp.maximum(h, 0.0)                      # [tile_bp, rh] f32

        # Layer 2: one bf16 MXU dot (block-diagonal W2 handles all packed rows).
        w2 = w2b2_ref[:rh, :]                        # [rh, ra] bf16
        b2 = w2b2_ref[rh:, :].astype(jnp.float32)    # [1, ra]
        v = jnp.dot(h.astype(jnp.bfloat16), w2,
                    preferred_element_type=jnp.float32) + b2
        out_ref[...] = v.astype(out_ref.dtype)

    return kernel


# --------------------------------------------------------------------------- #
# Host-side packing (done once, outside the hot path)
# --------------------------------------------------------------------------- #
def _packing_factor(n_inputs, n_hidden, n_actions):
    """Batch rows packed per 128-lane row (r*n_inputs == 128 when it divides)."""
    if n_inputs >= 128 or 128 % n_inputs != 0:
        return 1
    r = 128 // n_inputs
    # VMEM / vreg guard: keep the packed hidden/action widths reasonable.
    while r > 1 and r * max(n_hidden, n_actions) > 4096:
        r //= 2
    return r


def pack_svn_params(w1, b1, w2, b2):
    """Block-diagonal weight packing + bias folding + bf16 cast (one-time).

    Returns:
      w1b1: [r*n_inputs + 1, r*n_hidden]  bf16  (last row = b1 tiled r times)
      w2b2: [r*n_hidden + 1, r*n_actions] bf16  (last row = b2 tiled r times)
    """
    w1 = jnp.asarray(w1, jnp.float32)
    b1 = jnp.asarray(b1, jnp.float32)
    w2 = jnp.asarray(w2, jnp.float32)
    b2 = jnp.asarray(b2, jnp.float32)
    n_inputs, n_hidden = w1.shape
    n_actions = w2.shape[1]
    r = _packing_factor(n_inputs, n_hidden, n_actions)

    eye = jnp.eye(r, dtype=jnp.float32)
    w1_bd = jnp.kron(eye, w1)                              # [r*ni, r*nh], block-diag
    w2_bd = jnp.kron(eye, w2)                              # [r*nh, r*na], block-diag
    b1_t = jnp.tile(b1.reshape(1, n_hidden), (1, r))       # [1, r*nh]
    b2_t = jnp.tile(b2.reshape(1, n_actions), (1, r))      # [1, r*na]
    w1b1 = jnp.concatenate([w1_bd, b1_t], axis=0).astype(jnp.bfloat16)
    w2b2 = jnp.concatenate([w2_bd, b2_t], axis=0).astype(jnp.bfloat16)
    return w1b1, w2b2


# --------------------------------------------------------------------------- #
# Forward
# --------------------------------------------------------------------------- #
def svn_forward(state, w1b1, w2b2):
    """state: [B, n_inputs] (or [n_inputs]) -> state_value: [B, n_actions] f32."""
    state = jnp.asarray(state, jnp.float32)
    if state.ndim == 1:                    # mimic SVN._format's unsqueeze(0)
        state = state[None, :]
    B, n_inputs = state.shape

    rk = w1b1.shape[0] - 1                 # r * n_inputs
    rh = w1b1.shape[1]                     # r * n_hidden
    ra = w2b2.shape[1]                     # r * n_actions
    assert rk % n_inputs == 0, "packed params do not match state's n_inputs"
    r = rk // n_inputs
    assert w2b2.shape[0] == rh + 1 and rh % r == 0 and ra % r == 0
    n_actions = ra // r

    # ---- padding-aware batch tiling (units: packed rows of r batch rows) ----
    bp = _cdiv(B, r)
    # Lane-padded f32 footprint per packed row (x block + h intermediate + out
    # block); cap the tile at ~4 MiB of that and at 1024 packed rows (= 8192
    # batch rows at r=8), which amortizes the ~0.35 us/step overhead by >100x.
    row_bytes = 4 * (_lane_pad(rk) + _lane_pad(rh) + _lane_pad(ra))
    cap_p = min(1024, max(8, ((4 << 20) // row_bytes) // 8 * 8))
    n_tiles = _cdiv(bp, cap_p)
    if bp >= 128:
        # v7x: keep >= 2 grid steps so the "parallel" batch axis is sharded
        # across both TensorCores (harmless extra cheap step on v5e/v6e).
        n_tiles = max(n_tiles, 2)
    tile_bp = _round_up(_cdiv(bp, n_tiles), 8)    # f32 sublane granule
    n_tiles = _cdiv(bp, tile_bp)
    bp_pad = n_tiles * tile_bp
    b_pad = bp_pad * r

    if b_pad != B:
        # Zero-padded rows flow through as relu(b1) @ w2 + b2 (finite) and are
        # sliced off below; minimal padding thanks to the tile selection above.
        state = jnp.pad(state, ((0, b_pad - B), (0, 0)))
    # Free row-major reshape: packs r consecutive batch rows into one lane-row.
    xp = state.reshape(bp_pad, rk)

    kernel = _make_svn_kernel(rk, rh)
    out = pl.pallas_call(
        kernel,
        out_shape=jax.ShapeDtypeStruct((bp_pad, ra), jnp.float32),
        grid_spec=pltpu.PrefetchScalarGridSpec(
            num_scalar_prefetch=0,
            grid=(n_tiles,),
            in_specs=[
                # x streams per batch tile; the two packed weight operands are
                # pinned at block (0,0) -> fetched once, VMEM-resident.
                pl.BlockSpec((tile_bp, rk), lambda i: (i, 0)),
                pl.BlockSpec((rk + 1, rh), lambda i: (0, 0)),
                pl.BlockSpec((rh + 1, ra), lambda i: (0, 0)),
            ],
            out_specs=pl.BlockSpec((tile_bp, ra), lambda i: (i, 0)),
        ),
        compiler_params=pltpu.CompilerParams(
            dimension_semantics=("parallel",),     # independent batch tiles
        ),
    )(xp, w1b1, w2b2)

    # Row-major un-packing: [bp_pad, r*n_actions] -> [b_pad, n_actions].
    return out.reshape(b_pad, n_actions)[:B]


# --------------------------------------------------------------------------- #
# Init + references (for the self-test)
# --------------------------------------------------------------------------- #
def init_svn_params(key, n_inputs, n_hidden, n_actions=1):
    """Deterministic init mimicking torch.nn.Linear (uniform +/- 1/sqrt(fan_in))."""
    k1, k2, k3, k4 = jax.random.split(key, 4)
    bound1 = 1.0 / jnp.sqrt(jnp.float32(n_inputs))
    bound2 = 1.0 / jnp.sqrt(jnp.float32(n_hidden))
    # Stored as [in, out] (transpose of torch's [out, in]) to suit the kernel layout.
    w1 = jax.random.uniform(k1, (n_inputs, n_hidden), jnp.float32, -bound1, bound1)
    b1 = jax.random.uniform(k2, (n_hidden,), jnp.float32, -bound1, bound1)
    w2 = jax.random.uniform(k3, (n_hidden, n_actions), jnp.float32, -bound2, bound2)
    b2 = jax.random.uniform(k4, (n_actions,), jnp.float32, -bound2, bound2)
    return w1, b1, w2, b2


def _ref_forward_f32(x, w1, b1, w2, b2):
    return jnp.maximum(x @ w1 + b1, 0.0) @ w2 + b2


def _ref_forward_bf16_matched(x, w1, b1, w2, b2):
    # Same roundings as the kernel: operands rounded to bf16, f32 accumulation,
    # hidden activations re-rounded to bf16 before layer 2.
    r32 = lambda a: a.astype(jnp.bfloat16).astype(jnp.float32)
    h = jnp.maximum(r32(x) @ r32(w1) + r32(b1), 0.0)
    return r32(h) @ r32(w2) + r32(b2)


if __name__ == "__main__":
    n_inputs, n_hidden, n_actions = 16, 32, 1
    key = jax.random.PRNGKey(0)
    k_params, k_s1, k_s2, k_s3, k_s4, k_params2 = jax.random.split(key, 6)

    w1, b1, w2, b2 = init_svn_params(k_params, n_inputs, n_hidden, n_actions)
    w1b1, w2b2 = pack_svn_params(w1, b1, w2, b2)

    # 1) Small batch (single tile, pad-to-granule path).
    x1 = jax.random.normal(k_s1, (8, n_inputs), jnp.float32)
    y1 = jax.block_until_ready(svn_forward(x1, w1b1, w2b2))
    assert y1.shape == (8, n_actions)
    assert jnp.allclose(y1, _ref_forward_bf16_matched(x1, w1, b1, w2, b2),
                        atol=2e-3, rtol=2e-3)
    assert jnp.allclose(y1, _ref_forward_f32(x1, w1, b1, w2, b2),
                        atol=3e-2, rtol=3e-2)   # bf16 MXU operands -> loose f32 check

    # 2) Awkward batch (single tile + minimal padding: 600 -> 640, not 1024).
    x2 = jax.random.normal(k_s2, (600, n_inputs), jnp.float32)
    y2 = jax.block_until_ready(svn_forward(x2, w1b1, w2b2))
    assert y2.shape == (600, n_actions)
    assert jnp.allclose(y2, _ref_forward_bf16_matched(x2, w1, b1, w2, b2),
                        atol=2e-3, rtol=2e-3)
    assert jnp.allclose(y2, _ref_forward_f32(x2, w1, b1, w2, b2),
                        atol=3e-2, rtol=3e-2)

    # 3) Multi-tile path (grid > 1: exercises the batch pipeline / v7x split).
    x3 = jax.random.normal(k_s3, (1100, n_inputs), jnp.float32)
    y3 = jax.block_until_ready(svn_forward(x3, w1b1, w2b2))
    assert y3.shape == (1100, n_actions)
    assert jnp.allclose(y3, _ref_forward_bf16_matched(x3, w1, b1, w2, b2),
                        atol=2e-3, rtol=2e-3)

    # 4) 1-D state (mimics SVN._format's unsqueeze).
    x4 = jax.random.normal(k_s4, (n_inputs,), jnp.float32)
    y4 = jax.block_until_ready(svn_forward(x4, w1b1, w2b2))
    assert y4.shape == (1, n_actions)
    assert jnp.allclose(y4, _ref_forward_bf16_matched(x4[None], w1, b1, w2, b2),
                        atol=2e-3, rtol=2e-3)

    # 5) n_actions > 1 head (previously untested path; same fused kernel).
    w1m, b1m, w2m, b2m = init_svn_params(k_params2, n_inputs, n_hidden, 3)
    w1b1m, w2b2m = pack_svn_params(w1m, b1m, w2m, b2m)
    y5 = jax.block_until_ready(svn_forward(x2, w1b1m, w2b2m))
    assert y5.shape == (600, 3)
    assert jnp.allclose(y5, _ref_forward_bf16_matched(x2, w1m, b1m, w2m, b2m),
                        atol=2e-3, rtol=2e-3)

    print("KERNEL_OK")
</pallas_src>

<mosaic_0001>
module attributes {stable_mosaic.version = 11 : i64} {
  func.func @kernel(%arg0: i32, %arg1: memref<8x128xf32, #tpu.memory_space<vmem>>, %arg2: memref<129x256xbf16, #tpu.memory_space<vmem>>, %arg3: memref<257x8xbf16, #tpu.memory_space<vmem>>, %arg4: memref<8x8xf32, #tpu.memory_space<vmem>>) attributes {dimension_semantics = [#tpu.dimension_semantics<parallel>], iteration_bounds = array<i64: 1>, scalar_prefetch = 0 : i64, scratch_operands = 0 : i64, tpu.core_type = #tpu.core_type<tc>, window_params = [{transform_indices = @transform_0, window_bounds = array<i64: 8, 128>}, {pipeline_mode = #tpu.pipeline_mode<synchronous>, transform_indices = @transform_1, window_bounds = array<i64: 129, 256>}, {pipeline_mode = #tpu.pipeline_mode<synchronous>, transform_indices = @transform_2, window_bounds = array<i64: 257, 8>}, {transform_indices = @transform_3, window_bounds = array<i64: 8, 8>}]} {
    %c0 = arith.constant 0 : index
    %c0_0 = arith.constant 0 : index
    %0 = vector.load %arg1[%c0, %c0_0] : memref<8x128xf32, #tpu.memory_space<vmem>>, vector<8x128xf32>
    %1 = arith.truncf %0 : vector<8x128xf32> to vector<8x128xbf16>
    %c0_1 = arith.constant 0 : index
    %c0_2 = arith.constant 0 : index
    %2 = vector.load %arg2[%c0_1, %c0_2] : memref<129x256xbf16, #tpu.memory_space<vmem>>, vector<128x256xbf16>
    %c128 = arith.constant 128 : index
    %c0_3 = arith.constant 0 : index
    %3 = vector.load %arg2[%c128, %c0_3] : memref<129x256xbf16, #tpu.memory_space<vmem>>, vector<1x256xbf16>
    %4 = arith.extf %3 : vector<1x256xbf16> to vector<1x256xf32>
    %cst = arith.constant dense<0.000000e+00> : vector<8x256xf32>
    %5 = tpu.matmul %1, %2, %cst {dimension_numbers = #tpu.dot_dimension_numbers<[1], [0], [0], [1], [0, 0, 1, 1], [], []>} : vector<8x128xbf16>, vector<128x256xbf16>, vector<8x256xf32> -> vector<8x256xf32>
    %6 = vector.broadcast %4 : vector<1x256xf32> to vector<8x256xf32>
    %7 = arith.addf %5, %6 : vector<8x256xf32>
    %cst_4 = arith.constant 0.000000e+00 : f32
    %8 = vector.broadcast %cst_4 : f32 to vector<8x256xf32>
    %9 = arith.maximumf %7, %8 : vector<8x256xf32>
    %c0_5 = arith.constant 0 : index
    %c0_6 = arith.constant 0 : index
    %10 = vector.load %arg3[%c0_5, %c0_6] : memref<257x8xbf16, #tpu.memory_space<vmem>>, vector<256x8xbf16>
    %c256 = arith.constant 256 : index
    %c0_7 = arith.constant 0 : index
    %11 = vector.load %arg3[%c256, %c0_7] : memref<257x8xbf16, #tpu.memory_space<vmem>>, vector<1x8xbf16>
    %12 = arith.extf %11 : vector<1x8xbf16> to vector<1x8xf32>
    %13 = arith.truncf %9 : vector<8x256xf32> to vector<8x256xbf16>
    %cst_8 = arith.constant dense<0.000000e+00> : vector<8x8xf32>
    %14 = tpu.matmul %13, %10, %cst_8 {dimension_numbers = #tpu.dot_dimension_numbers<[1], [0], [0], [1], [0, 0, 1, 1], [], []>} : vector<8x256xbf16>, vector<256x8xbf16>, vector<8x8xf32> -> vector<8x8xf32>
    %15 = vector.broadcast %12 : vector<1x8xf32> to vector<8x8xf32>
    %16 = arith.addf %14, %15 : vector<8x8xf32>
    %c0_9 = arith.constant 0 : index
    %c0_10 = arith.constant 0 : index
    %17 = vector.load %arg4[%c0_9, %c0_10] : memref<8x8xf32, #tpu.memory_space<vmem>>, vector<8x8xf32>
    tpu.vector_store %arg4[%c0_9, %c0_10], %16 {strides = array<i32>} : memref<8x8xf32, #tpu.memory_space<vmem>>, vector<8x8xf32>,
    return
  }
  func.func @transform_0(%arg0: i32) -> (i32, i32) {
    %c0_i32 = arith.constant 0 : i32
    %c0_i32_0 = arith.constant 0 : i32
    return %arg0, %c0_i32 : i32, i32
  }
  func.func @transform_1(%arg0: i32) -> (i32, i32) {
    %c0_i32 = arith.constant 0 : i32
    %c0_i32_0 = arith.constant 0 : i32
    %c0_i32_1 = arith.constant 0 : i32
    return %c0_i32, %c0_i32_0 : i32, i32
  }
  func.func @transform_2(%arg0: i32) -> (i32, i32) {
    %c0_i32 = arith.constant 0 : i32
    %c0_i32_0 = arith.constant 0 : i32
    %c0_i32_1 = arith.constant 0 : i32
    return %c0_i32, %c0_i32_0 : i32, i32
  }
  func.func @transform_3(%arg0: i32) -> (i32, i32) {
    %c0_i32 = arith.constant 0 : i32
    %c0_i32_0 = arith.constant 0 : i32
    return %arg0, %c0_i32 : i32, i32
  }
}

</mosaic_0001>

<llo_original>
// kernel: tpu_custom_call.1
$region0: #{tpu_custom_call.1}
  #allocation0 [shape = 'u32[]', space=smem, size = 0x4, offset = 0x4, fixed_abs, tag = 'smem constant byte address 0x4 - core index']
  #allocation1 [shape = 'u32[144,128]{1,0:T(1,128)}', space=vmem, size = 0x12000, scoped, tag = 'internal scratch']
  %s0 = inlined_call_operand.vmem [shape: f32[8,128], index: 0, kind: input, shape index: {}]
  %s1 = inlined_call_operand.vmem [shape: bf16[129,256], index: 1, kind: input, shape index: {}]
  %s2 = inlined_call_operand.vmem [shape: bf16[257,8], index: 2, kind: input, shape index: {}]
  %s3 = inlined_call_operand.hbm [shape: f32[8,8], index: 3, kind: output, shape index: {}]
  %s4 = sld [smem:[#allocation0]]
  $region22: #{tpu_custom_call.1} parent=0
    _
  %s6 = ssub.s32 1, %s4
  %s7 = scalar_select 0, %s6, %s4
  $region1: #{tpu_custom_call.1} parent=0
    #allocation2 [shape = 'u8[4096]{0}', space=vmem, size = 0x1000, scoped, tag = 'output window, operand 0, single buffered']
    #allocation3 [shape = 's32[1]{0}', space=sflag, size = 0x4, scoped, tag = 'scoped memory for tpu_custom_call.1']
    %8 = vsyncpa [#allocation3], 0
    // Predicated region
    $region2: #{tpu_custom_call.1} parent=1 // pred_check
      _
    $region3: #{tpu_custom_call.1} parent=1 // pred_check_branch
      %10 = sbr.rel (0) target = $region5
    $region4: #{tpu_custom_call.1} parent=1 // pred_region
      _
    $region5: #{tpu_custom_call.1} parent=1 // pred_fallthru
      _
    // Predicated region
    $region6: #{tpu_custom_call.1} parent=1 // pred_check
      _
    $region7: #{tpu_custom_call.1} parent=1 // pred_check_branch
      %12 = sbr.rel (0) target = $region9
    $region8: #{tpu_custom_call.1} parent=1 // pred_region
      _
    $region9: #{tpu_custom_call.1} parent=1 // pred_fallthru
      _
    // Predicated region
    $region10: #{tpu_custom_call.1} parent=1 // pred_check
      _
    $region11: #{tpu_custom_call.1} parent=1 // pred_check_branch
      %14 = sbr.rel (0) target = $region13
    $region12: #{tpu_custom_call.1} parent=1 // pred_region
      _
    $region13: #{tpu_custom_call.1} parent=1 // pred_fallthru
      _
    %v16 = vld [vmem:[%s0] sm:$0xff]
    %v17 = vpack.c.bf16 %v16, %v16
    %v18 = vld [vmem:[%s1] sm:$0xff]
    %v19 = vld [vmem:[%s1 + $0x8] sm:$0xff]
    %v20 = vld [vmem:[%s1 + $0x10] sm:$0xff]
    %v21 = vld [vmem:[%s1 + $0x18] sm:$0xff]
    %v22 = vld [vmem:[%s1 + $0x20] sm:$0xff]
    %v23 = vld [vmem:[%s1 + $0x28] sm:$0xff]
    %v24 = vld [vmem:[%s1 + $0x30] sm:$0xff]
    %v25 = vld [vmem:[%s1 + $0x38] sm:$0xff]
    %v26 = vld [vmem:[%s1 + $0x40] sm:$0xff]
    %v27 = vld [vmem:[%s1 + $0x48] sm:$0xff]
    %v28 = vld [vmem:[%s1 + $0x50] sm:$0xff]
    %v29 = vld [vmem:[%s1 + $0x58] sm:$0xff]
    %v30 = vld [vmem:[%s1 + $0x60] sm:$0xff]
    %v31 = vld [vmem:[%s1 + $0x68] sm:$0xff]
    %v32 = vld [vmem:[%s1 + $0x70] sm:$0xff]
    %v33 = vld [vmem:[%s1 + $0x78] sm:$0xff]
    %v34 = vld [vmem:[%s1 + $0x80] sm:$0x11]
    %v35 = vunpack.c.l.bf16 %v34
    %v36 = vunpack.c.h.bf16 %v34
    %v37 = vlaneseq
    %v38 = vshrl.u32 %v37, 7
    %v39 = vsub.s32 0, %v38
    %v40 = vrot.slane %v35, %v39
    %v41 = vlaneseq
    %v42 = vshrl.u32 %v41, 7
    %v43 = vsub.s32 0, %v42
    %v44 = vrot.slane %v36, %v43
    %v61 = vunpack.c.l.b16 %v18
    %v62 = vunpack.c.h.b16 %v18
    %v63 = vunpack.c.l.b16 %v19
    %v64 = vunpack.c.h.b16 %v19
    %v65 = vunpack.c.l.b16 %v20
    %v66 = vunpack.c.h.b16 %v20
    %v67 = vunpack.c.l.b16 %v21
    %v68 = vunpack.c.h.b16 %v21
    %v69 = vunpack.c.l.b16 %v22
    %v70 = vunpack.c.h.b16 %v22
    %v71 = vunpack.c.l.b16 %v23
    %v72 = vunpack.c.h.b16 %v23
    %v73 = vunpack.c.l.b16 %v24
    %v74 = vunpack.c.h.b16 %v24
    %v75 = vunpack.c.l.b16 %v25
    %v76 = vunpack.c.h.b16 %v25
    %v77 = vunpack.c.l.b16 %v26
    %v78 = vunpack.c.h.b16 %v26
    %v79 = vunpack.c.l.b16 %v27
    %v80 = vunpack.c.h.b16 %v27
    %v81 = vunpack.c.l.b16 %v28
    %v82 = vunpack.c.h.b16 %v28
    %v83 = vunpack.c.l.b16 %v29
    %v84 = vunpack.c.h.b16 %v29
    %v85 = vunpack.c.l.b16 %v30
    %v86 = vunpack.c.h.b16 %v30
    %v87 = vunpack.c.l.b16 %v31
    %v88 = vunpack.c.h.b16 %v31
    %v89 = vunpack.c.l.b16 %v32
    %v90 = vunpack.c.h.b16 %v32
    %v91 = vunpack.c.l.b16 %v33
    %v92 = vunpack.c.h.b16 %v33
    %v93 = vpack.c.b16 %v63, %v61
    %v94 = vpack.c.b16 %v64, %v62
    %v95 = vpack.c.b16 %v67, %v65
    %v96 = vpack.c.b16 %v68, %v66
    %v97 = vpack.c.b16 %v71, %v69
    %v98 = vpack.c.b16 %v72, %v70
    %v99 = vpack.c.b16 %v75, %v73
    %v100 = vpack.c.b16 %v76, %v74
    %v101 = vpack.c.b16 %v79, %v77
    %v102 = vpack.c.b16 %v80, %v78
    %v103 = vpack.c.b16 %v83, %v81
    %v104 = vpack.c.b16 %v84, %v82
    %v105 = vpack.c.b16 %v87, %v85
    %v106 = vpack.c.b16 %v88, %v86
    %v107 = vpack.c.b16 %v91, %v89
    %v108 = vpack.c.b16 %v92, %v90
    %125 = vmatprep.subr.bf16.mxu0 %v94
    %126 = vmatpush1.bf16.msra.mxu0 %v93
    %127 = vmatprep.subr.bf16.mxu0 %v96
    %128 = vmatpush1.bf16.msra.mxu0 %v95
    %129 = vmatprep.subr.bf16.mxu0 %v98
    %130 = vmatpush1.bf16.msra.mxu0 %v97
    %131 = vmatprep.subr.bf16.mxu0 %v100
    %132 = vmatpush1.bf16.msra.mxu0 %v99
    %133 = vmatprep.subr.bf16.mxu0 %v102
    %134 = vmatpush1.bf16.msra.mxu0 %v101
    %135 = vmatprep.subr.bf16.mxu0 %v104
    %136 = vmatpush1.bf16.msra.mxu0 %v103
    %137 = vmatprep.subr.bf16.mxu0 %v106
    %138 = vmatpush1.bf16.msra.mxu0 %v105
    %139 = vmatprep.subr.bf16.mxu0 %v108
    %140 = vmatpush1.bf16.msra.mxu0 %v107
    %141 = vmatprep.subr.bf16.mxu0 0
    %142 = vmatpush1.bf16.msra.mxu0 0
    %143 = vmatprep.subr.bf16.mxu0 0
    %144 = vmatpush1.bf16.msra.mxu0 0
    %145 = vmatprep.subr.bf16.mxu0 0
    %146 = vmatpush1.bf16.msra.mxu0 0
    %147 = vmatprep.subr.bf16.mxu0 0
    %148 = vmatpush1.bf16.msra.mxu0 0
    %149 = vmatprep.subr.bf16.mxu0 0
    %150 = vmatpush1.bf16.msra.mxu0 0
    %151 = vmatprep.subr.bf16.mxu0 0
    %152 = vmatpush1.bf16.msra.mxu0 0
    %153 = vmatprep.subr.bf16.mxu0 0
    %154 = vmatpush1.bf16.msra.mxu0 0
    %155 = vmatprep.subr.bf16.mxu0 0
    %156 = vmatpush1.bf16.msra.mxu0 0
    %157 = vmatprep.mubr.bf16.mxu0 0
    %158 = vmatmul.mubr.bf16.gmra.mrb[0].mxu0 %v17
    %v159 = vpop.f32.mrb[0].mxu0
    %v160 = vadd.f32 %v40, %v159
    %v161 = vpop.f32.mrb[0].mxu0
    %v162 = vadd.f32 %v44, %v161
    %v163 = vpop.f32.mrb[0].mxu0
    %v164 = vpop.f32.mrb[0].mxu0
    %165 = vdwg.mxu0
    %v166 = vmax.f32 %v160, 0.0
    %v167 = vmax.f32 %v162, 0.0
    %v168 = vld [vmem:[%s2] sm:$0xf]
    %v169 = vld [vmem:[%s2 + $0x4] sm:$0xf]
    %v170 = vld [vmem:[%s2 + $0x8] sm:$0xf]
    %v171 = vld [vmem:[%s2 + $0xc] sm:$0xf]
    %v172 = vld [vmem:[%s2 + $0x10] sm:$0xf]
    %v173 = vld [vmem:[%s2 + $0x14] sm:$0xf]
    %v174 = vld [vmem:[%s2 + $0x18] sm:$0xf]
    %v175 = vld [vmem:[%s2 + $0x1c] sm:$0xf]
    %v176 = vld [vmem:[%s2 + $0x20] sm:$0xf]
    %v177 = vld [vmem:[%s2 + $0x24] sm:$0xf]
    %v178 = vld [vmem:[%s2 + $0x28] sm:$0xf]
    %v179 = vld [vmem:[%s2 + $0x2c] sm:$0xf]
    %v180 = vld [vmem:[%s2 + $0x30] sm:$0xf]
    %v181 = vld [vmem:[%s2 + $0x34] sm:$0xf]
    %v182 = vld [vmem:[%s2 + $0x38] sm:$0xf]
    %v183 = vld [vmem:[%s2 + $0x3c] sm:$0xf]
    %v184 = vld [vmem:[%s2 + $0x40] sm:$0xf]
    %v185 = vld [vmem:[%s2 + $0x44] sm:$0xf]
    %v186 = vld [vmem:[%s2 + $0x48] sm:$0xf]
    %v187 = vld [vmem:[%s2 + $0x4c] sm:$0xf]
    %v188 = vld [vmem:[%s2 + $0x50] sm:$0xf]
    %v189 = vld [vmem:[%s2 + $0x54] sm:$0xf]
    %v190 = vld [vmem:[%s2 + $0x58] sm:$0xf]
    %v191 = vld [vmem:[%s2 + $0x5c] sm:$0xf]
    %v192 = vld [vmem:[%s2 + $0x60] sm:$0xf]
    %v193 = vld [vmem:[%s2 + $0x64] sm:$0xf]
    %v194 = vld [vmem:[%s2 + $0x68] sm:$0xf]
    %v195 = vld [vmem:[%s2 + $0x6c] sm:$0xf]
    %v196 = vld [vmem:[%s2 + $0x70] sm:$0xf]
    %v197 = vld [vmem:[%s2 + $0x74] sm:$0xf]
    %v198 = vld [vmem:[%s2 + $0x78] sm:$0xf]
    %v199 = vld [vmem:[%s2 + $0x7c] sm:$0xf]
    %v200 = vld [vmem:[%s2 + $0x80] sm:$0x1]
    %v201 = vunpack.c.l.bf16 %v200
    %v202 = vpack.c.bf16 %v166, %v166
    %v203 = vpack.c.bf16 %v167, %v167
    %v204 = vlaneseq
    %v205 = vshrl.u32 %v204, 7
    %v206 = vsub.s32 0, %v205
    %v207 = vrot.slane %v201, %v206
    %v240 = vunpack.c.l.b16 %v168
    %v241 = vunpack.c.l.b16 %v169
    %v242 = vunpack.c.l.b16 %v170
    %v243 = vunpack.c.l.b16 %v171
    %v244 = vunpack.c.l.b16 %v172
    %v245 = vunpack.c.l.b16 %v173
    %v246 = vunpack.c.l.b16 %v174
    %v247 = vunpack.c.l.b16 %v175
    %v248 = vunpack.c.l.b16 %v176
    %v249 = vunpack.c.l.b16 %v177
    %v250 = vunpack.c.l.b16 %v178
    %v251 = vunpack.c.l.b16 %v179
    %v252 = vunpack.c.l.b16 %v180
    %v253 = vunpack.c.l.b16 %v181
    %v254 = vunpack.c.l.b16 %v182
    %v255 = vunpack.c.l.b16 %v183
    %v256 = vunpack.c.l.b16 %v184
    %v257 = vunpack.c.l.b16 %v185
    %v258 = vunpack.c.l.b16 %v186
    %v259 = vunpack.c.l.b16 %v187
    %v260 = vunpack.c.l.b16 %v188
    %v261 = vunpack.c.l.b16 %v189
    %v262 = vunpack.c.l.b16 %v190
    %v263 = vunpack.c.l.b16 %v191
    %v264 = vunpack.c.l.b16 %v192
    %v265 = vunpack.c.l.b16 %v193
    %v266 = vunpack.c.l.b16 %v194
    %v267 = vunpack.c.l.b16 %v195
    %v268 = vunpack.c.l.b16 %v196
    %v269 = vunpack.c.l.b16 %v197
    %v270 = vunpack.c.l.b16 %v198
    %v271 = vunpack.c.l.b16 %v199
    %v272 = vpack.c.b16 %v241, %v240
    %v273 = vpack.c.b16 %v243, %v242
    %v274 = vpack.c.b16 %v245, %v244
    %v275 = vpack.c.b16 %v247, %v246
    %v276 = vpack.c.b16 %v249, %v248
    %v277 = vpack.c.b16 %v251, %v250
    %v278 = vpack.c.b16 %v253, %v252
    %v279 = vpack.c.b16 %v255, %v254
    %v280 = vpack.c.b16 %v257, %v256
    %v281 = vpack.c.b16 %v259, %v258
    %v282 = vpack.c.b16 %v261, %v260
    %v283 = vpack.c.b16 %v263, %v262
    %v284 = vpack.c.b16 %v265, %v264
    %v285 = vpack.c.b16 %v267, %v266
    %v286 = vpack.c.b16 %v269, %v268
    %v287 = vpack.c.b16 %v271, %v270
    %304 = vmatprep.subr.bf16.mxu0 0
    %305 = vmatpush1.bf16.msra.mxu0 %v272
    %306 = vmatprep.subr.bf16.mxu0 0
    %307 = vmatpush1.bf16.msra.mxu0 %v273
    %308 = vmatprep.subr.bf16.mxu0 0
    %309 = vmatpush1.bf16.msra.mxu0 %v274
    %310 = vmatprep.subr.bf16.mxu0 0
    %311 = vmatpush1.bf16.msra.mxu0 %v275
    %312 = vmatprep.subr.bf16.mxu0 0
    %313 = vmatpush1.bf16.msra.mxu0 %v276
    %314 = vmatprep.subr.bf16.mxu0 0
    %315 = vmatpush1.bf16.msra.mxu0 %v277
    %316 = vmatprep.subr.bf16.mxu0 0
    %317 = vmatpush1.bf16.msra.mxu0 %v278
    %318 = vmatprep.subr.bf16.mxu0 0
    %319 = vmatpush1.bf16.msra.mxu0 %v279
    %320 = vmatprep.subr.bf16.mxu0 0
    %321 = vmatpush1.bf16.msra.mxu0 %v280
    %322 = vmatprep.subr.bf16.mxu0 0
    %323 = vmatpush1.bf16.msra.mxu0 %v281
    %324 = vmatprep.subr.bf16.mxu0 0
    %325 = vmatpush1.bf16.msra.mxu0 %v282
    %326 = vmatprep.subr.bf16.mxu0 0
    %327 = vmatpush1.bf16.msra.mxu0 %v283
    %328 = vmatprep.subr.bf16.mxu0 0
    %329 = vmatpush1.bf16.msra.mxu0 %v284
    %330 = vmatprep.subr.bf16.mxu0 0
    %331 = vmatpush1.bf16.msra.mxu0 %v285
    %332 = vmatprep.subr.bf16.mxu0 0
    %333 = vmatpush1.bf16.msra.mxu0 %v286
    %334 = vmatprep.subr.bf16.mxu0 0
    %335 = vmatpush1.bf16.msra.mxu0 %v287
    %336 = vmatprep.mubr.bf16.mxu0 %v203
    %337 = vmatmul.mubr.bf16.gmra.mrb[0].mxu0 %v202
    %v338 = vpop.f32.mrb[0].mxu0
    %v339 = vadd.f32 %v207, %v338
    %v340 = vpop.f32.mrb[0].mxu0
    %v341 = vpop.f32.mrb[0].mxu0
    %v342 = vpop.f32.mrb[0].mxu0
    %343 = vdwg.mxu0
    %vm344 = vcmask 64512
    %345 = vst.msk [vmem:[#allocation2] sm:$0xff] %vm344, %v339
    // Predicated region
    $region14: #{tpu_custom_call.1} parent=1 // pred_check
      _
    $region15: #{tpu_custom_call.1} parent=1 // pred_check_branch
      %347 = sbr.rel (0) target = $region17
    $region16: #{tpu_custom_call.1} parent=1 // pred_region
      %s349 = ssub.s32 128, 128
      %350 = vsyncadd [#allocation3], %s349
      %s352 = sshll.u32 [#allocation2], 4
      %s353 = int_to_ptr.vmem [resolvable:$true] %s352
      %355 = dma.vmem_to_hbm [thread:$0]  %s353, 128, %s3, [#allocation3]
    $region17: #{tpu_custom_call.1} parent=1 // pred_fallthru
      _
    // Predicated region
    $region18: #{tpu_custom_call.1} parent=1 // pred_check
      _
    $region19: #{tpu_custom_call.1} parent=1 // pred_check_branch
      %357 = sbr.rel (0) target = $region21
    $region20: #{tpu_custom_call.1} parent=1 // pred_region
      %358 = dma.done [#allocation3], 128
    $region21: #{tpu_custom_call.1} parent=1 // pred_fallthru
      _
    %359 = vsyncpa [#allocation3], 1

</llo_original>
